<compile_context>
chip_gen: v7x
topology: tpu7x:2x2x1
jax: 0.10.0
libtpu: 0.0.40
codegen_flags: <defaults>
</compile_context>

<pallas_src>
import jax
import jax.numpy as jnp
from jax.experimental import pallas as pl
from jax.experimental.pallas import tpu as pltpu


def _sigmoid(x):
    # Exact form: exp on the EUP + full-precision divide.  An approx reciprocal
    # (pl.reciprocal(..., approx=True)) would be cheaper but its relative error is
    # too close to the 1e-4 test tolerance for a twice-applied sigmoid.
    return 1.0 / (1.0 + jnp.exp(-x))


def _transmit_kernel(seq_ref, seqc_ref, w2_ref, at_ref, bT_ref, trT_ref, o_ref):
    # seq_ref : (1, C*T, V)  streamed, lane-dense on V; X[c*T+t, v] = seq[n, c, v, t]
    # seqc_ref: (1, U, C, T) streamed; one batch element of seq_cluster, node-major
    # w2_ref  : (1, T)       conv2 1x1 weight (lane row), VMEM-resident
    # at_ref  : (C, C*T)     A_T[c', c*T+t] = conv1_w[c] * w[t, c'], VMEM-resident
    # bT_ref  : (U, V)       b transposed, VMEM-resident
    # trT_ref : (U, V)       transmit transposed, VMEM-resident
    # o_ref   : (1, U, V)    output coefs (transposed; wrapper restores (V, U))
    xc = seqc_ref[0]                                                       # (U, C, T)

    # conv2 (1x1, tem_size -> 1): f2_T[u, c] = sum_t conv2_w[t] * seq_cluster[n, c, u, t]
    f2_t = jnp.sum(xc * w2_ref[...], axis=-1)                              # (U, C)

    # Effective weight of the fused conv1 / w / f2 chain:
    #   Weff[u, c*T+t] = conv1_w[c] * (w @ f2)[t, u]
    weff = jnp.dot(f2_t, at_ref[...], preferred_element_type=jnp.float32)  # (U, C*T)

    # Single V-sized GEMM on the MXU (K = C*T, N = V), lane-dense on V.
    pre = jnp.dot(weff, seq_ref[0], preferred_element_type=jnp.float32)    # (U, V)
    logits = _sigmoid(pre + bT_ref[...])

    a = jnp.mean(logits, axis=-1, keepdims=True)                           # mean over nodes -> (U, 1)
    logits = _sigmoid(logits - a)

    o_ref[0] = (logits * trT_ref[...]).astype(o_ref.dtype)


def transmit_forward(seq, seq_cluster, conv1_w, conv2_w, w, b, transmit):
    """Transmit.forward.

    seq:         (N, C, V, T)   C = c_in, V = num_nodes, T = tem_size
    seq_cluster: (N, C, U, T)   U = cluster_nodes
    conv1_w:     (C,)           conv1 1x1 weight (out_channels=1)
    conv2_w:     (T,)           conv2 1x1 weight (out_channels=1)
    w:           (T, C)
    b:           (V, U)
    transmit:    (V, U)
    returns coefs: (N, V, U)
    """
    N, C, V, T = seq.shape
    N2, C2, U, T2 = seq_cluster.shape
    assert N2 == N and C2 == C and T2 == T
    assert conv1_w.shape == (C,)
    assert conv2_w.shape == (T,)
    assert w.shape == (T, C)
    assert b.shape == (V, U)
    assert transmit.shape == (V, U)

    # --- wrapper-side layout plumbing (lane-dense slabs for the kernel) ---------------
    # X[n, c*T+t, v] = seq[n, c, v, t]   -> the kernel's big GEMM RHS, V in lanes.
    seq_t = jnp.transpose(seq, (0, 1, 3, 2)).reshape(N, C * T, V)
    # seq_cluster, node-major: (N, U, C, T)
    seqc_t = jnp.transpose(seq_cluster, (0, 2, 1, 3))
    # Parameter-only effective-weight factor: A_T[c', c*T+t] = conv1_w[c] * w[t, c'].
    a_t = (conv1_w[:, None, None] * w[None, :, :]).reshape(C * T, C).T     # (C, C*T)
    w2_row = conv2_w.reshape(1, T)
    b_t = b.T                                                              # (U, V)
    tr_t = transmit.T                                                      # (U, V)

    out_t = pl.pallas_call(
        _transmit_kernel,
        out_shape=jax.ShapeDtypeStruct((N, U, V), jnp.float32),
        grid_spec=pltpu.PrefetchScalarGridSpec(
            num_scalar_prefetch=0,
            grid=(N,),
            in_specs=[
                pl.BlockSpec((1, C * T, V), lambda n: (n, 0, 0)),     # seq slab (streamed)
                pl.BlockSpec((1, U, C, T), lambda n: (n, 0, 0, 0)),   # seq_cluster slab (streamed)
                pl.BlockSpec((1, T), lambda n: (0, 0)),               # conv2_w row (resident)
                pl.BlockSpec((C, C * T), lambda n: (0, 0)),           # A_T (resident)
                pl.BlockSpec((U, V), lambda n: (0, 0)),               # b^T (resident)
                pl.BlockSpec((U, V), lambda n: (0, 0)),               # transmit^T (resident)
            ],
            out_specs=pl.BlockSpec((1, U, V), lambda n: (n, 0, 0)),
        ),
        compiler_params=pltpu.CompilerParams(
            dimension_semantics=("parallel",),     # batch shards across TensorCores
            vmem_limit_bytes=48 * 1024 * 1024,     # safe on v5e/v6e (128 MiB) and v7x (64 MiB)
        ),
    )(seq_t, seqc_t, w2_row, a_t, b_t, tr_t)
    # TODO(synk): for N==1 (or odd N) on v7x's 2 TCs, add a V-tiling parallel grid axis with a
    # (1,U) column-sum scratch and a pl.when finalize for the mean-over-nodes, so both cores work.

    # Small output transpose back to the module's (N, V, U) convention.
    return jnp.transpose(out_t, (0, 2, 1))


if __name__ == "__main__":
    key = jax.random.PRNGKey(0)
    ks = jax.random.split(key, 7)

    # batch=2, c_in=4, num_nodes=16, cluster_nodes=8, tem_size=16
    N, C, V, U, T = 2, 4, 16, 8, 16

    seq = jax.random.normal(ks[0], (N, C, V, T), dtype=jnp.float32)
    seq_cluster = jax.random.normal(ks[1], (N, C, U, T), dtype=jnp.float32)
    conv1_w = jax.random.normal(ks[2], (C,), dtype=jnp.float32) * 0.5
    conv2_w = jax.random.normal(ks[3], (T,), dtype=jnp.float32) * 0.5
    w = jax.random.normal(ks[4], (T, C), dtype=jnp.float32) * (1.0 / jnp.sqrt(T))
    b = jax.random.normal(ks[5], (V, U), dtype=jnp.float32) * 0.1
    transmit = (jax.random.uniform(ks[6], (V, U)) > 0.5).astype(jnp.float32)

    out = transmit_forward(seq, seq_cluster, conv1_w, conv2_w, w, b, transmit)
    out = jax.block_until_ready(out)

    # Pure-JAX reference mirroring the PyTorch forward.
    hp = jax.lax.Precision.HIGHEST
    f1 = jnp.einsum("ncvt,c->nvt", seq, conv1_w, precision=hp)
    f2 = jnp.einsum("ncut,t->ncu", seq_cluster, conv2_w, precision=hp)
    g = jnp.einsum("nvt,tc->nvc", f1, w, precision=hp)
    logits = jax.nn.sigmoid(jnp.einsum("nvc,ncu->nvu", g, f2, precision=hp) + b)
    a = jnp.mean(logits, axis=1, keepdims=True)
    ref = jax.nn.sigmoid(logits - a) * transmit

    assert out.shape == (N, V, U)
    assert jnp.allclose(out, ref, atol=1e-4, rtol=1e-4), float(jnp.max(jnp.abs(out - ref)))

    print("KERNEL_OK")
</pallas_src>

<mosaic_0001>
module attributes {stable_mosaic.version = 11 : i64} {
  func.func @_transmit_kernel(%arg0: i32, %arg1: memref<1x64x16xf32, #tpu.memory_space<vmem>>, %arg2: memref<1x8x4x16xf32, #tpu.memory_space<vmem>>, %arg3: memref<1x16xf32, #tpu.memory_space<vmem>>, %arg4: memref<4x64xf32, #tpu.memory_space<vmem>>, %arg5: memref<8x16xf32, #tpu.memory_space<vmem>>, %arg6: memref<8x16xf32, #tpu.memory_space<vmem>>, %arg7: memref<1x8x16xf32, #tpu.memory_space<vmem>>) attributes {dimension_semantics = [#tpu.dimension_semantics<parallel>], iteration_bounds = array<i64: 2>, scalar_prefetch = 0 : i64, scratch_operands = 0 : i64, tpu.core_type = #tpu.core_type<tc>, window_params = [{transform_indices = @transform_0, window_bounds = array<i64: 1, 64, 16>}, {transform_indices = @transform_1, window_bounds = array<i64: 1, 8, 4, 16>}, {pipeline_mode = #tpu.pipeline_mode<synchronous>, transform_indices = @transform_2, window_bounds = array<i64: 1, 16>}, {pipeline_mode = #tpu.pipeline_mode<synchronous>, transform_indices = @transform_3, window_bounds = array<i64: 4, 64>}, {pipeline_mode = #tpu.pipeline_mode<synchronous>, transform_indices = @transform_4, window_bounds = array<i64: 8, 16>}, {pipeline_mode = #tpu.pipeline_mode<synchronous>, transform_indices = @transform_5, window_bounds = array<i64: 8, 16>}, {transform_indices = @transform_6, window_bounds = array<i64: 1, 8, 16>}]} {
    %c0 = arith.constant 0 : index
    %c0_0 = arith.constant 0 : index
    %c0_1 = arith.constant 0 : index
    %c0_2 = arith.constant 0 : index
    %0 = vector.load %arg2[%c0, %c0_0, %c0_1, %c0_2] : memref<1x8x4x16xf32, #tpu.memory_space<vmem>>, vector<1x8x4x16xf32>
    %1 = vector.shape_cast %0 : vector<1x8x4x16xf32> to vector<8x4x16xf32>
    %c0_3 = arith.constant 0 : index
    %c0_4 = arith.constant 0 : index
    %2 = vector.load %arg3[%c0_3, %c0_4] : memref<1x16xf32, #tpu.memory_space<vmem>>, vector<1x16xf32>
    %3 = vector.shape_cast %2 : vector<1x16xf32> to vector<1x1x16xf32>
    %4 = vector.broadcast %3 : vector<1x1x16xf32> to vector<8x4x16xf32>
    %5 = arith.mulf %1, %4 : vector<8x4x16xf32>
    %cst = arith.constant dense<0.000000e+00> : vector<8x4xf32>
    %6 = vector.multi_reduction <add>, %5, %cst [2] : vector<8x4x16xf32> to vector<8x4xf32>
    %c0_5 = arith.constant 0 : index
    %c0_6 = arith.constant 0 : index
    %7 = vector.load %arg4[%c0_5, %c0_6] : memref<4x64xf32, #tpu.memory_space<vmem>>, vector<4x64xf32>
    %cst_7 = arith.constant dense<0.000000e+00> : vector<8x64xf32>
    %8 = tpu.matmul %6, %7, %cst_7 {dimension_numbers = #tpu.dot_dimension_numbers<[1], [0], [0], [1], [0, 0, 1, 1], [], []>} : vector<8x4xf32>, vector<4x64xf32>, vector<8x64xf32> -> vector<8x64xf32>
    %c0_8 = arith.constant 0 : index
    %c0_9 = arith.constant 0 : index
    %c0_10 = arith.constant 0 : index
    %9 = vector.load %arg1[%c0_8, %c0_9, %c0_10] : memref<1x64x16xf32, #tpu.memory_space<vmem>>, vector<1x64x16xf32>
    %10 = vector.shape_cast %9 : vector<1x64x16xf32> to vector<64x16xf32>
    %cst_11 = arith.constant dense<0.000000e+00> : vector<8x16xf32>
    %11 = tpu.matmul %8, %10, %cst_11 {dimension_numbers = #tpu.dot_dimension_numbers<[1], [0], [0], [1], [0, 0, 1, 1], [], []>} : vector<8x64xf32>, vector<64x16xf32>, vector<8x16xf32> -> vector<8x16xf32>
    %c0_12 = arith.constant 0 : index
    %c0_13 = arith.constant 0 : index
    %12 = vector.load %arg5[%c0_12, %c0_13] : memref<8x16xf32, #tpu.memory_space<vmem>>, vector<8x16xf32>
    %13 = arith.addf %11, %12 : vector<8x16xf32>
    %cst_14 = arith.constant 0.000000e+00 : f32
    %14 = vector.broadcast %cst_14 : f32 to vector<8x16xf32>
    %15 = arith.subf %14, %13 : vector<8x16xf32>
    %16 = math.exp %15 : vector<8x16xf32>
    %cst_15 = arith.constant 1.000000e+00 : f32
    %17 = vector.broadcast %cst_15 : f32 to vector<8x16xf32>
    %18 = arith.addf %17, %16 : vector<8x16xf32>
    %cst_16 = arith.constant 1.000000e+00 : f32
    %19 = vector.broadcast %cst_16 : f32 to vector<8x16xf32>
    %20 = arith.divf %19, %18 : vector<8x16xf32>
    %cst_17 = arith.constant dense<0.000000e+00> : vector<8xf32>
    %21 = vector.multi_reduction <add>, %20, %cst_17 [1] : vector<8x16xf32> to vector<8xf32>
    %22 = vector.shape_cast %21 : vector<8xf32> to vector<8x1xf32>
    %cst_18 = arith.constant 1.600000e+01 : f32
    %23 = vector.broadcast %cst_18 : f32 to vector<8x1xf32>
    %24 = arith.divf %22, %23 : vector<8x1xf32>
    %25 = vector.broadcast %24 : vector<8x1xf32> to vector<8x16xf32>
    %26 = arith.subf %20, %25 : vector<8x16xf32>
    %cst_19 = arith.constant 0.000000e+00 : f32
    %27 = vector.broadcast %cst_19 : f32 to vector<8x16xf32>
    %28 = arith.subf %27, %26 : vector<8x16xf32>
    %29 = math.exp %28 : vector<8x16xf32>
    %cst_20 = arith.constant 1.000000e+00 : f32
    %30 = vector.broadcast %cst_20 : f32 to vector<8x16xf32>
    %31 = arith.addf %30, %29 : vector<8x16xf32>
    %cst_21 = arith.constant 1.000000e+00 : f32
    %32 = vector.broadcast %cst_21 : f32 to vector<8x16xf32>
    %33 = arith.divf %32, %31 : vector<8x16xf32>
    %c0_22 = arith.constant 0 : index
    %c0_23 = arith.constant 0 : index
    %34 = vector.load %arg6[%c0_22, %c0_23] : memref<8x16xf32, #tpu.memory_space<vmem>>, vector<8x16xf32>
    %35 = arith.mulf %33, %34 : vector<8x16xf32>
    %c0_24 = arith.constant 0 : index
    %c0_25 = arith.constant 0 : index
    %c0_26 = arith.constant 0 : index
    %36 = vector.load %arg7[%c0_24, %c0_25, %c0_26] : memref<1x8x16xf32, #tpu.memory_space<vmem>>, vector<1x8x16xf32>
    %37 = vector.shape_cast %36 : vector<1x8x16xf32> to vector<8x16xf32>
    %38 = vector.shape_cast %35 : vector<8x16xf32> to vector<1x8x16xf32>
    tpu.vector_store %arg7[%c0_24, %c0_25, %c0_26], %38 {strides = array<i32>} : memref<1x8x16xf32, #tpu.memory_space<vmem>>, vector<1x8x16xf32>,
    return
  }
  func.func @transform_0(%arg0: i32) -> (i32, i32, i32) {
    %c0_i32 = arith.constant 0 : i32
    %c0_i32_0 = arith.constant 0 : i32
    %c0_i32_1 = arith.constant 0 : i32
    return %arg0, %c0_i32, %c0_i32_0 : i32, i32, i32
  }
  func.func @transform_1(%arg0: i32) -> (i32, i32, i32, i32) {
    %c0_i32 = arith.constant 0 : i32
    %c0_i32_0 = arith.constant 0 : i32
    %c0_i32_1 = arith.constant 0 : i32
    %c0_i32_2 = arith.constant 0 : i32
    return %arg0, %c0_i32, %c0_i32_0, %c0_i32_1 : i32, i32, i32, i32
  }
  func.func @transform_2(%arg0: i32) -> (i32, i32) {
    %c0_i32 = arith.constant 0 : i32
    %c0_i32_0 = arith.constant 0 : i32
    %c0_i32_1 = arith.constant 0 : i32
    return %c0_i32, %c0_i32_0 : i32, i32
  }
  func.func @transform_3(%arg0: i32) -> (i32, i32) {
    %c0_i32 = arith.constant 0 : i32
    %c0_i32_0 = arith.constant 0 : i32
    %c0_i32_1 = arith.constant 0 : i32
    return %c0_i32, %c0_i32_0 : i32, i32
  }
  func.func @transform_4(%arg0: i32) -> (i32, i32) {
    %c0_i32 = arith.constant 0 : i32
    %c0_i32_0 = arith.constant 0 : i32
    %c0_i32_1 = arith.constant 0 : i32
    return %c0_i32, %c0_i32_0 : i32, i32
  }
  func.func @transform_5(%arg0: i32) -> (i32, i32) {
    %c0_i32 = arith.constant 0 : i32
    %c0_i32_0 = arith.constant 0 : i32
    %c0_i32_1 = arith.constant 0 : i32
    return %c0_i32, %c0_i32_0 : i32, i32
  }
  func.func @transform_6(%arg0: i32) -> (i32, i32, i32) {
    %c0_i32 = arith.constant 0 : i32
    %c0_i32_0 = arith.constant 0 : i32
    %c0_i32_1 = arith.constant 0 : i32
    return %arg0, %c0_i32, %c0_i32_0 : i32, i32, i32
  }
}

</mosaic_0001>

<llo_original>
// kernel: tpu_custom_call.1
$region0: #{tpu_custom_call.1}
  #allocation0 [shape = 'u32[]', space=smem, size = 0x4, offset = 0x4, fixed_abs, tag = 'smem constant byte address 0x4 - core index']
  #allocation1 [shape = 'u32[144,128]{1,0:T(1,128)}', space=vmem, size = 0x12000, scoped, tag = 'internal scratch']
  %s0 = inlined_call_operand.vmem [shape: f32[2,64,16], index: 0, kind: input, shape index: {}]
  %s1 = inlined_call_operand.vmem [shape: f32[2,8,4,16], index: 1, kind: input, shape index: {}]
  %s2 = inlined_call_operand.vmem [shape: f32[1,16], index: 2, kind: input, shape index: {}]
  %s3 = inlined_call_operand.vmem [shape: f32[4,64], index: 3, kind: input, shape index: {}]
  %s4 = inlined_call_operand.vmem [shape: f32[8,16], index: 4, kind: input, shape index: {}]
  %s5 = inlined_call_operand.vmem [shape: f32[8,16], index: 5, kind: input, shape index: {}]
  %s6 = inlined_call_operand.hbm [shape: f32[2,8,16], index: 6, kind: output, shape index: {}]
  %s7 = sld [smem:[#allocation0]]
  $region57: #{tpu_custom_call.1} parent=0
    _
  %s9 = ssub.s32 1, %s7
  %s10 = scalar_select 0, %s9, %s7
  $region1: #{tpu_custom_call.1} parent=0
    #allocation2 [shape = 'u8[8192]{0}', space=vmem, size = 0x2000, scoped, tag = 'output window, operand 0']
    #allocation3 [shape = 's32[2]{0}', space=sflag, size = 0x8, scoped, tag = 'scoped memory for tpu_custom_call.1']
    %11 = vsyncpa [#allocation3], 0
    %s12 = scalar_lea.sflag [#allocation3], 1
    %13 = vsyncpa %s12, 0
    loop: start=0, step=1, limit=4
    $region2: #{tpu_custom_call.1} parent=1 // loop_pre_header
      _
    $region3: #{tpu_custom_call.1} parent=1 // loop_header
      %s15 = sphi 0, %s19
      %p16 = scmp.ge.s32.totalorder %s15, 4
      %s25 = sphi 0, %s27
      %s28 = sphi 0, %s25
      %s29 = sphi 0, %s28
      %s45 = sphi 0, %s29
      %s51 = sphi 0, %s53
      %s54 = sphi 0, %s51
      %s55 = sphi 0, %s54
      %s71 = sphi 0, %s55
      %s75 = sphi 0, %s75
      %s77 = sphi 0, %s75
      %s78 = sphi 0, %s77
      %s92 = sphi 0, %s78
      %s96 = sphi 0, %s96
      %s98 = sphi 0, %s96
      %s99 = sphi 0, %s98
      %s113 = sphi 0, %s99
      %s117 = sphi 0, %s117
      %s119 = sphi 0, %s117
      %s120 = sphi 0, %s119
      %s134 = sphi 0, %s120
      %s138 = sphi 0, %s138
      %s140 = sphi 0, %s138
      %s141 = sphi 0, %s140
      %s155 = sphi 0, %s141
      %s161 = sphi 0, %s163
      %s164 = sphi 0, %s161
      %s165 = sphi 0, %s164
      %s181 = sphi 0, %s165
    $region4: #{tpu_custom_call.1} parent=1 // loop_header_branch
      %18 = sbr.rel (%p16) target = $region8
    $region5: #{tpu_custom_call.1} parent=1 // loop_body
      %s20 = ssub.s32 %s15, 1
      %s21 = ssub.s32 %s15, 2
      %s22 = sadd.s32 %s15, 1
      %s23 = ssub.s32 %s15, %s22
      %p24 = scmp.eq.s32.totalorder %s23, 0
      %s26 = sadd.s32 %s25, 1
      %s27 = scalar_select %p24, %s25, %s26
      %p30 = pneg %p24
      %p31 = scmp.eq.s32.totalorder %s15, 1
      %p32 = por %p30, %p31
      %p33 = scmp.ne.s32.totalorder %s25, %s28
      %p34 = scmp.eq.s32.totalorder %s15, 0
      %p35 = por %p33, %p34
      %p36 = scmp.ne.s32.totalorder %s25, %s28
      %p37 = scmp.eq.s32.totalorder %s20, 1
      %p38 = por %p36, %p37
      %p39 = scmp.ne.s32.totalorder %s28, %s29
      %p40 = scmp.eq.s32.totalorder %s20, 0
      %p41 = por %p39, %p40
      %p42 = scmp.ne.s32.totalorder %s28, %s29
      %p43 = scmp.eq.s32.totalorder %s21, 1
      %p44 = por %p42, %p43
      %p46 = scmp.ne.s32.totalorder %s29, %s45
      %p47 = scmp.eq.s32.totalorder %s21, 0
      %p48 = por %p46, %p47
      %s49 = ssub.s32 %s15, %s22
      %p50 = scmp.eq.s32.totalorder %s49, 0
      %s52 = sadd.s32 %s51, 1
      %s53 = scalar_select %p50, %s51, %s52
      %p56 = pneg %p50
      %p57 = scmp.eq.s32.totalorder %s15, 1
      %p58 = por %p56, %p57
      %p59 = scmp.ne.s32.totalorder %s51, %s54
      %p60 = scmp.eq.s32.totalorder %s15, 0
      %p61 = por %p59, %p60
      %p62 = scmp.ne.s32.totalorder %s51, %s54
      %p63 = scmp.eq.s32.totalorder %s20, 1
      %p64 = por %p62, %p63
      %p65 = scmp.ne.s32.totalorder %s54, %s55
      %p66 = scmp.eq.s32.totalorder %s20, 0
      %p67 = por %p65, %p66
      %p68 = scmp.ne.s32.totalorder %s54, %s55
      %p69 = scmp.eq.s32.totalorder %s21, 1
      %p70 = por %p68, %p69
      %p72 = scmp.ne.s32.totalorder %s55, %s71
      %p73 = scmp.eq.s32.totalorder %s21, 0
      %p74 = por %p72, %p73
      %s76 = sadd.s32 %s75, 1
      %p79 = scmp.eq.s32.totalorder %s15, 1
      %p80 = scmp.ne.s32.totalorder %s75, %s77
      %p81 = scmp.eq.s32.totalorder %s15, 0
      %p82 = por %p80, %p81
      %p83 = scmp.ne.s32.totalorder %s75, %s77
      %p84 = scmp.eq.s32.totalorder %s20, 1
      %p85 = por %p83, %p84
      %p86 = scmp.ne.s32.totalorder %s77, %s78
      %p87 = scmp.eq.s32.totalorder %s20, 0
      %p88 = por %p86, %p87
      %p89 = scmp.ne.s32.totalorder %s77, %s78
      %p90 = scmp.eq.s32.totalorder %s21, 1
      %p91 = por %p89, %p90
      %p93 = scmp.ne.s32.totalorder %s78, %s92
      %p94 = scmp.eq.s32.totalorder %s21, 0
      %p95 = por %p93, %p94
      %s97 = sadd.s32 %s96, 1
      %p100 = scmp.eq.s32.totalorder %s15, 1
      %p101 = scmp.ne.s32.totalorder %s96, %s98
      %p102 = scmp.eq.s32.totalorder %s15, 0
      %p103 = por %p101, %p102
      %p104 = scmp.ne.s32.totalorder %s96, %s98
      %p105 = scmp.eq.s32.totalorder %s20, 1
      %p106 = por %p104, %p105
      %p107 = scmp.ne.s32.totalorder %s98, %s99
      %p108 = scmp.eq.s32.totalorder %s20, 0
      %p109 = por %p107, %p108
      %p110 = scmp.ne.s32.totalorder %s98, %s99
      %p111 = scmp.eq.s32.totalorder %s21, 1
      %p112 = por %p110, %p111
      %p114 = scmp.ne.s32.totalorder %s99, %s113
      %p115 = scmp.eq.s32.totalorder %s21, 0
      %p116 = por %p114, %p115
      %s118 = sadd.s32 %s117, 1
      %p121 = scmp.eq.s32.totalorder %s15, 1
      %p122 = scmp.ne.s32.totalorder %s117, %s119
      %p123 = scmp.eq.s32.totalorder %s15, 0
      %p124 = por %p122, %p123
      %p125 = scmp.ne.s32.totalorder %s117, %s119
      %p126 = scmp.eq.s32.totalorder %s20, 1
      %p127 = por %p125, %p126
      %p128 = scmp.ne.s32.totalorder %s119, %s120
      %p129 = scmp.eq.s32.totalorder %s20, 0
      %p130 = por %p128, %p129
      %p131 = scmp.ne.s32.totalorder %s119, %s120
      %p132 = scmp.eq.s32.totalorder %s21, 1
      %p133 = por %p131, %p132
      %p135 = scmp.ne.s32.totalorder %s120, %s134
      %p136 = scmp.eq.s32.totalorder %s21, 0
      %p137 = por %p135, %p136
      %s139 = sadd.s32 %s138, 1
      %p142 = scmp.eq.s32.totalorder %s15, 1
      %p143 = scmp.ne.s32.totalorder %s138, %s140
      %p144 = scmp.eq.s32.totalorder %s15, 0
      %p145 = por %p143, %p144
      %p146 = scmp.ne.s32.totalorder %s138, %s140
      %p147 = scmp.eq.s32.totalorder %s20, 1
      %p148 = por %p146, %p147
      %p149 = scmp.ne.s32.totalorder %s140, %s141
      %p150 = scmp.eq.s32.totalorder %s20, 0
      %p151 = por %p149, %p150
      %p152 = scmp.ne.s32.totalorder %s140, %s141
      %p153 = scmp.eq.s32.totalorder %s21, 1
      %p154 = por %p152, %p153
      %p156 = scmp.ne.s32.totalorder %s141, %s155
      %p157 = scmp.eq.s32.totalorder %s21, 0
      %p158 = por %p156, %p157
      %s159 = ssub.s32 %s15, %s22
      %p160 = scmp.eq.s32.totalorder %s159, 0
      %s162 = sadd.s32 %s161, 1
      %s163 = scalar_select %p160, %s161, %s162
      %p166 = pneg %p160
      %p167 = scmp.eq.s32.totalorder %s15, 1
      %p168 = por %p166, %p167
      %p169 = scmp.ne.s32.totalorder %s161, %s164
      %p170 = scmp.eq.s32.totalorder %s15, 0
      %p171 = por %p169, %p170
      %p172 = scmp.ne.s32.totalorder %s161, %s164
      %p173 = scmp.eq.s32.totalorder %s20, 1
      %p174 = por %p172, %p173
      %p175 = scmp.ne.s32.totalorder %s164, %s165
      %p176 = scmp.eq.s32.totalorder %s20, 0
      %p177 = por %p175, %p176
      %p178 = scmp.ne.s32.totalorder %s164, %s165
      %p179 = scmp.eq.s32.totalorder %s21, 1
      %p180 = por %p178, %p179
      %p182 = scmp.ne.s32.totalorder %s165, %s181
      %p183 = scmp.eq.s32.totalorder %s21, 0
      %p184 = por %p182, %p183
      %p185 = scmp.le.s32.totalorder 1, %s15
      %p186 = scmp.lt.s32.totalorder %s15, 3
      %p187 = pnand %p185, %p186
      %p188 = pneg %p187
      // Predicated region
      $region9: #{tpu_custom_call.1} parent=5 // pred_check
        _
      $region10: #{tpu_custom_call.1} parent=5 // pred_check_branch
        %190 = sbr.rel (%p187) target = $region12
      $region11: #{tpu_custom_call.1} parent=5 // pred_region
        %s191 = ssub.s32 %s15, 1
        // Predicated region
        $region13: #{tpu_custom_call.1} parent=11 // pred_check
          %p192 = pneg %p88
        $region14: #{tpu_custom_call.1} parent=11 // pred_check_branch
          %194 = sbr.rel (%p192) target = $region16
        $region15: #{tpu_custom_call.1} parent=11 // pred_region
          _
        $region16: #{tpu_custom_call.1} parent=11 // pred_fallthru
          _
        // Predicated region
        $region17: #{tpu_custom_call.1} parent=11 // pred_check
          %p195 = pneg %p109
        $region18: #{tpu_custom_call.1} parent=11 // pred_check_branch
          %197 = sbr.rel (%p195) target = $region20
        $region19: #{tpu_custom_call.1} parent=11 // pred_region
          _
        $region20: #{tpu_custom_call.1} parent=11 // pred_fallthru
          _
        // Predicated region
        $region21: #{tpu_custom_call.1} parent=11 // pred_check
          %p198 = pneg %p130
        $region22: #{tpu_custom_call.1} parent=11 // pred_check_branch
          %200 = sbr.rel (%p198) target = $region24
        $region23: #{tpu_custom_call.1} parent=11 // pred_region
          _
        $region24: #{tpu_custom_call.1} parent=11 // pred_fallthru
          _
        // Predicated region
        $region25: #{tpu_custom_call.1} parent=11 // pred_check
          %p201 = pneg %p151
        $region26: #{tpu_custom_call.1} parent=11 // pred_check_branch
          %203 = sbr.rel (%p201) target = $region28
        $region27: #{tpu_custom_call.1} parent=11 // pred_region
          _
        $region28: #{tpu_custom_call.1} parent=11 // pred_fallthru
          _
      $region12: #{tpu_custom_call.1} parent=5 // pred_fallthru
        _
      %p204 = scmp.lt.s32.totalorder %s15, 2
      // Predicated region
      $region29: #{tpu_custom_call.1} parent=5 // pred_check
        %p205 = pneg %p204
      $region30: #{tpu_custom_call.1} parent=5 // pred_check_branch
        %207 = sbr.rel (%p205) target = $region32
      $region31: #{tpu_custom_call.1} parent=5 // pred_region
        // Predicated region
        $region33: #{tpu_custom_call.1} parent=31 // pred_check
          %p208 = pneg %p35
        $region34: #{tpu_custom_call.1} parent=31 // pred_check_branch
          %210 = sbr.rel (%p208) target = $region36
        $region35: #{tpu_custom_call.1} parent=31 // pred_region
          %p211 = scmp.lt.s32.totalorder %s15, 1
          %s212 = scalar_select %p211, %s15, 1
          %s213 = smul.addr %s212, 8
          %s214 = smul.addr %s213, 8
          %s215 = scalar_lea.vmem %s0, %s214
        $region36: #{tpu_custom_call.1} parent=31 // pred_fallthru
          _
        // Predicated region
        $region37: #{tpu_custom_call.1} parent=31 // pred_check
          %p216 = pneg %p61
        $region38: #{tpu_custom_call.1} parent=31 // pred_check_branch
          %218 = sbr.rel (%p216) target = $region40
        $region39: #{tpu_custom_call.1} parent=31 // pred_region
          %p219 = scmp.lt.s32.totalorder %s15, 1
          %s220 = scalar_select %p219, %s15, 1
          %s221 = smul.addr %s220, 8
          %s222 = smul.addr %s221, 4
          %s223 = scalar_lea.vmem %s1, %s222
        $region40: #{tpu_custom_call.1} parent=31 // pred_fallthru
          _
      $region32: #{tpu_custom_call.1} parent=5 // pred_fallthru
        _
      %p224 = scmp.le.s32.totalorder 1, %s15
      %p225 = scmp.lt.s32.totalorder %s15, 3
      %p226 = pnand %p224, %p225
      %p227 = pneg %p226
      // Predicated region
      $region41: #{tpu_custom_call.1} parent=5 // pred_check
        _
      $region42: #{tpu_custom_call.1} parent=5 // pred_check_branch
        %229 = sbr.rel (%p226) target = $region44
      $region43: #{tpu_custom_call.1} parent=5 // pred_region
        %s230 = ssub.s32 %s15, 1
        %p231 = scmp.lt.s32.totalorder %s20, 1
        %s232 = scalar_select %p231, %s20, 1
        %s233 = smul.addr %s232, 8
        %s234 = smul.addr %s233, 8
        %s235 = scalar_lea.vmem %s0, %s234
        %p236 = pneg %p41
        %p237 = pneg %p38
        %p238 = scmp.lt.s32.totalorder %s20, 1
        %s239 = scalar_select %p238, %s20, 1
        %s240 = smul.addr %s239, 8
        %s241 = smul.addr %s240, 4
        %s242 = scalar_lea.vmem %s1, %s241
        %p243 = pneg %p67
        %p244 = pneg %p64
        %p245 = pneg %p88
        %p246 = pneg %p85
        %p247 = pneg %p109
        %p248 = pneg %p106
        %p249 = pneg %p130
        %p250 = pneg %p127
        %p251 = pneg %p151
        %p252 = pneg %p148
        %p253 = pneg %p177
        %p254 = pneg %p174
        %s255 = sand.u32 %s164, 1
        %s256 = scalar_lea.sflag [#allocation3], %s255
        %s257 = sand.u32 %s164, 1
        %s258 = smul.addr %s257, 8
        %s259 = scalar_lea.vmem [#allocation2], %s258
        %p260 = scmp.lt.s32.totalorder %s20, 1
        %s261 = scalar_select %p260, %s20, 1
        %s262 = smul.addr %s261, 8
        %s263 = smul.addr %s262, 8
        %s264 = scalar_lea.vmem %s0, %s263
        %p265 = scmp.lt.s32.totalorder %s20, 1
        %s266 = scalar_select %p265, %s20, 1
        %s267 = smul.addr %s266, 8
        %s268 = smul.addr %s267, 4
        %s269 = scalar_lea.vmem %s1, %s268
        %v270 = vld [vmem:[%s269] sm:$0xf]
        %v271 = vld [vmem:[%s269 + $0x4] sm:$0xf]
        %v272 = vld [vmem:[%s269 + $0x8] sm:$0xf]
        %v273 = vld [vmem:[%s269 + $0xc] sm:$0xf]
        %v274 = vld [vmem:[%s269 + $0x10] sm:$0xf]
        %v275 = vld [vmem:[%s269 + $0x14] sm:$0xf]
        %v276 = vld [vmem:[%s269 + $0x18] sm:$0xf]
        %v277 = vld [vmem:[%s269 + $0x1c] sm:$0xf]
        %v278 = vld [vmem:[%s2] sm:$0x1]
        %v280 = vlaneseq
        %v281 = vshrl.u32 %v280, 7
        %v282 = vsub.s32 0, %v281
        %v283 = vrot.slane %v278, %v282
        %v285 = vmul.f32 %v270, %v283
        %v286 = vmul.f32 %v271, %v283
        %v287 = vmul.f32 %v272, %v283
        %v288 = vmul.f32 %v273, %v283
        %v289 = vmul.f32 %v274, %v283
        %v290 = vmul.f32 %v275, %v283
        %v291 = vmul.f32 %v276, %v283
        %v292 = vmul.f32 %v277, %v283
        %vm293 = vcmask 125952
        %v294 = vsel %vm293, %v285, 0.0
        %295 = vadd.xlane.f32.xlu0 %v294
        %v296 = vpop.xlane.xlu0 %295
        %v297 = vsel %vm293, %v286, 0.0
        %298 = vadd.xlane.f32.xlu0 %v297
        %v299 = vpop.xlane.xlu0 %298
        %v300 = vsel %vm293, %v287, 0.0
        %301 = vadd.xlane.f32.xlu0 %v300
        %v302 = vpop.xlane.xlu0 %301
        %v303 = vsel %vm293, %v288, 0.0
        %304 = vadd.xlane.f32.xlu0 %v303
        %v305 = vpop.xlane.xlu0 %304
        %v306 = vsel %vm293, %v289, 0.0
        %307 = vadd.xlane.f32.xlu0 %v306
        %v308 = vpop.xlane.xlu0 %307
        %v309 = vsel %vm293, %v290, 0.0
        %310 = vadd.xlane.f32.xlu0 %v309
        %v311 = vpop.xlane.xlu0 %310
        %v312 = vsel %vm293, %v291, 0.0
        %313 = vadd.xlane.f32.xlu0 %v312
        %v314 = vpop.xlane.xlu0 %313
        %v315 = vsel %vm293, %v292, 0.0
        %316 = vadd.xlane.f32.xlu0 %v315
        %v317 = vpop.xlane.xlu0 %316
        %v318 = vld [vmem:[%s3] sm:$0xf]
        %v327 = vlaneseq
        %v328 = vand.u32 %v327, 127
        %v329 = vlaneseq
        %v330 = vshrl.u32 %v329, 7
        %v331 = vsub.s32 %v328, %v330
        %v332 = vrot.slane %v296, %v331
        %v333 = vlaneseq
        %v334 = vshrl.u32 %v333, 7
        %v335 = vsub.s32 %v328, %v334
        %v336 = vrot.slane %v299, %v335
        %v337 = vlaneseq
        %v338 = vshrl.u32 %v337, 7
        %v339 = vsub.s32 %v328, %v338
        %v340 = vrot.slane %v302, %v339
        %v341 = vlaneseq
        %v342 = vshrl.u32 %v341, 7
        %v343 = vsub.s32 %v328, %v342
        %v344 = vrot.slane %v305, %v343
        %v345 = vlaneseq
        %v346 = vshrl.u32 %v345, 7
        %v347 = vsub.s32 %v328, %v346
        %v348 = vrot.slane %v308, %v347
        %v349 = vlaneseq
        %v350 = vshrl.u32 %v349, 7
        %v351 = vsub.s32 %v328, %v350
        %v352 = vrot.slane %v311, %v351
        %v353 = vlaneseq
        %v354 = vshrl.u32 %v353, 7
        %v355 = vsub.s32 %v328, %v354
        %v356 = vrot.slane %v314, %v355
        %v357 = vlaneseq
        %v358 = vshrl.u32 %v357, 7
        %v359 = vsub.s32 %v328, %v358
        %v360 = vrot.slane %v317, %v359
        %vm361 = vcmask 1041409
        %v362 = vsel %vm361, %v336, %v332
        %vm363 = vcmask 1042434
        %v364 = vsel %vm363, %v340, %v362
        %vm365 = vcmask 1043459
        %v366 = vsel %vm365, %v344, %v364
        %vm367 = vcmask 1044484
        %v368 = vsel %vm367, %v348, %v366
        %vm369 = vcmask 1045509
        %v370 = vsel %vm369, %v352, %v368
        %vm371 = vcmask 1046534
        %v372 = vsel %vm371, %v356, %v370
        %vm373 = vcmask 1047559
        %v374 = vsel %vm373, %v360, %v372
        %vm375 = vcmask 31744
        %v376 = vsel %vm375, %v374, 0
        %vm378 = vcmask 1043456
        %v380 = vsel %vm378, %v318, 0
        %382 = vmatprep.subr.mxu0 0.0
        %383 = vmatpush1.msra.mxu0 %v380
        %384 = vmatprep.subr.mxu0 0.0
        %385 = vmatpush1.msra.mxu0 0.0
        %386 = vmatprep.subr.mxu0 0.0
        %387 = vmatpush1.msra.mxu0 0.0
        %388 = vmatprep.subr.mxu0 0.0
        %389 = vmatpush1.msra.mxu0 0.0
        %390 = vmatprep.subr.mxu0 0.0
        %391 = vmatpush1.msra.mxu0 0.0
        %392 = vmatprep.subr.mxu0 0.0
        %393 = vmatpush1.msra.mxu0 0.0
        %394 = vmatprep.subr.mxu0 0.0
        %395 = vmatpush1.msra.mxu0 0.0
        %396 = vmatprep.subr.mxu0 0.0
        %397 = vmatpush1.msra.mxu0 0.0
        %398 = vmatprep.subr.mxu0 0.0
        %399 = vmatpush1.msra.mxu0 0.0
        %400 = vmatprep.subr.mxu0 0.0
        %401 = vmatpush1.msra.mxu0 0.0
        %402 = vmatprep.subr.mxu0 0.0
        %403 = vmatpush1.msra.mxu0 0.0
        %404 = vmatprep.subr.mxu0 0.0
        %405 = vmatpush1.msra.mxu0 0.0
        %406 = vmatprep.subr.mxu0 0.0
        %407 = vmatpush1.msra.mxu0 0.0
        %408 = vmatprep.subr.mxu0 0.0
        %409 = vmatpush1.msra.mxu0 0.0
        %410 = vmatprep.subr.mxu0 0.0
        %411 = vmatpush1.msra.mxu0 0.0
        %412 = vmatprep.subr.mxu0 0.0
        %413 = vmatpush1.msra.mxu0 0.0
        %414 = vmatprep.subr.mxu0 0.0
        %415 = vmatpush1.msra.mxu0 0.0
        %416 = vmatprep.subr.mxu0 0.0
        %417 = vmatpush1.msra.mxu0 0.0
        %418 = vmatprep.subr.mxu0 0.0
        %419 = vmatpush1.msra.mxu0 0.0
        %420 = vmatprep.subr.mxu0 0.0
        %421 = vmatpush1.msra.mxu0 0.0
        %422 = vmatprep.subr.mxu0 0.0
        %423 = vmatpush1.msra.mxu0 0.0
        %424 = vmatprep.subr.mxu0 0.0
        %425 = vmatpush1.msra.mxu0 0.0
        %426 = vmatprep.subr.mxu0 0.0
        %427 = vmatpush1.msra.mxu0 0.0
        %428 = vmatprep.subr.mxu0 0.0
        %429 = vmatpush1.msra.mxu0 0.0
        %430 = vmatprep.subr.mxu0 0.0
        %431 = vmatpush1.msra.mxu0 0.0
        %432 = vmatprep.subr.mxu0 0.0
        %433 = vmatpush1.msra.mxu0 0.0
        %434 = vmatprep.subr.mxu0 0.0
        %435 = vmatpush1.msra.mxu0 0.0
        %436 = vmatprep.subr.mxu0 0.0
        %437 = vmatpush1.msra.mxu0 0.0
        %438 = vmatprep.subr.mxu0 0.0
        %439 = vmatpush1.msra.mxu0 0.0
        %440 = vmatprep.subr.mxu0 0.0
        %441 = vmatpush1.msra.mxu0 0.0
        %442 = vmatprep.subr.mxu0 0.0
        %443 = vmatpush1.msra.mxu0 0.0
        %444 = vmatprep.subr.mxu0 0.0
        %445 = vmatpush1.msra.mxu0 0.0
        %446 = vmatprep.mubr.f32.mxu0 0.0
        %447 = vmatmul.mubr.f32.gmra.mrb[0].mxu0 %v376
        %v448 = vpop.f32.mrb[0].mxu0
        %v449 = vadd.f32 0.0, %v448
        %v450 = vpop.f32.mrb[0].mxu0
        %451 = vdwg.mxu0
        %v452 = vld [vmem:[%s264] sm:$0xff]
        %v453 = vld [vmem:[%s264 + $0x8] sm:$0xff]
        %v454 = vld [vmem:[%s264 + $0x10] sm:$0xff]
        %v455 = vld [vmem:[%s264 + $0x18] sm:$0xff]
        %v456 = vld [vmem:[%s264 + $0x20] sm:$0xff]
        %v457 = vld [vmem:[%s264 + $0x28] sm:$0xff]
        %v458 = vld [vmem:[%s264 + $0x30] sm:$0xff]
        %v459 = vld [vmem:[%s264 + $0x38] sm:$0xff]
        %v460 = vld [vmem:[%s4] sm:$0xff]
        %vm461 = vcmask 523264
        %v463 = vsel %vm461, %v449, 0
        %465 = vmatprep.subr.mxu0 0.0
        %466 = vmatpush1.msra.mxu0 %v452
        %467 = vmatprep.subr.mxu0 0.0
        %468 = vmatpush1.msra.mxu0 %v453
        %469 = vmatprep.subr.mxu0 0.0
        %470 = vmatpush1.msra.mxu0 %v454
        %471 = vmatprep.subr.mxu0 0.0
        %472 = vmatpush1.msra.mxu0 %v455
        %473 = vmatprep.subr.mxu0 0.0
        %474 = vmatpush1.msra.mxu0 %v456
        %475 = vmatprep.subr.mxu0 0.0
        %476 = vmatpush1.msra.mxu0 %v457
        %477 = vmatprep.subr.mxu0 0.0
        %478 = vmatpush1.msra.mxu0 %v458
        %479 = vmatprep.subr.mxu0 0.0
        %480 = vmatpush1.msra.mxu0 %v459
        %481 = vmatprep.subr.mxu0 0.0
        %482 = vmatpush1.msra.mxu0 0.0
        %483 = vmatprep.subr.mxu0 0.0
        %484 = vmatpush1.msra.mxu0 0.0
        %485 = vmatprep.subr.mxu0 0.0
        %486 = vmatpush1.msra.mxu0 0.0
        %487 = vmatprep.subr.mxu0 0.0
        %488 = vmatpush1.msra.mxu0 0.0
        %489 = vmatprep.subr.mxu0 0.0
        %490 = vmatpush1.msra.mxu0 0.0
        %491 = vmatprep.subr.mxu0 0.0
        %492 = vmatpush1.msra.mxu0 0.0
        %493 = vmatprep.subr.mxu0 0.0
        %494 = vmatpush1.msra.mxu0 0.0
        %495 = vmatprep.subr.mxu0 0.0
        %496 = vmatpush1.msra.mxu0 0.0
        %497 = vmatprep.subr.mxu0 0.0
        %498 = vmatpush1.msra.mxu0 0.0
        %499 = vmatprep.subr.mxu0 0.0
        %500 = vmatpush1.msra.mxu0 0.0
        %501 = vmatprep.subr.mxu0 0.0
        %502 = vmatpush1.msra.mxu0 0.0
        %503 = vmatprep.subr.mxu0 0.0
        %504 = vmatpush1.msra.mxu0 0.0
        %505 = vmatprep.subr.mxu0 0.0
        %506 = vmatpush1.msra.mxu0 0.0
        %507 = vmatprep.subr.mxu0 0.0
        %508 = vmatpush1.msra.mxu0 0.0
        %509 = vmatprep.subr.mxu0 0.0
        %510 = vmatpush1.msra.mxu0 0.0
        %511 = vmatprep.subr.mxu0 0.0
        %512 = vmatpush1.msra.mxu0 0.0
        %513 = vmatprep.subr.mxu0 0.0
        %514 = vmatpush1.msra.mxu0 0.0
        %515 = vmatprep.subr.mxu0 0.0
        %516 = vmatpush1.msra.mxu0 0.0
        %517 = vmatprep.subr.mxu0 0.0
        %518 = vmatpush1.msra.mxu0 0.0
        %519 = vmatprep.subr.mxu0 0.0
        %520 = vmatpush1.msra.mxu0 0.0
        %521 = vmatprep.subr.mxu0 0.0
        %522 = vmatpush1.msra.mxu0 0.0
        %523 = vmatprep.subr.mxu0 0.0
        %524 = vmatpush1.msra.mxu0 0.0
        %525 = vmatprep.subr.mxu0 0.0
        %526 = vmatpush1.msra.mxu0 0.0
        %527 = vmatprep.subr.mxu0 0.0
        %528 = vmatpush1.msra.mxu0 0.0
        %529 = vmatprep.mubr.f32.mxu0 0.0
        %530 = vmatmul.mubr.f32.gmra.mrb[0].mxu0 %v463
        %v531 = vpop.f32.mrb[0].mxu0
        %v532 = vadd.f32 %v460, %v531
        %v533 = vpop.f32.mrb[0].mxu0
        %534 = vdwg.mxu0
        %v535 = vsub.f32 0.0, %v532
        %v536 = vmul.f32 %v535, 1.442695
        %v537 = vpow.pop %v536
        %v538 = vadd.f32 %v537, 1.0
        %v539 = vrcp.pop %v538
        %v540 = vmul.f32 1.0, %v539
        %vm541 = vcmask 130048
        %v542 = vsel %vm541, %v540, 0.0
        %543 = vadd.xlane.f32.xlu0 %v542
        %v544 = vpop.xlane.xlu0 %543
        %v545 = vrcp.pop 16.0
        %v546 = vmul.f32 %v544, %v545
        %v547 = vsub.f32 %v540, %v546
        %v548 = vsub.f32 0.0, %v547
        %v549 = vmul.f32 %v548, 1.442695
        %v550 = vpow.pop %v549
        %v551 = vadd.f32 %v550, 1.0
        %v552 = vrcp.pop %v551
        %v553 = vmul.f32 1.0, %v552
        %v554 = vld [vmem:[%s5] sm:$0xff]
        %v555 = vmul.f32 %v553, %v554
        %556 = vst.msk [vmem:[%s259] sm:$0xff] %vm541, %v555
        %s557 = sand.u32 %s164, 1
        %s558 = scalar_lea.sflag [#allocation3], %s557
        %s559 = sand.u32 %s164, 1
        %s560 = smul.addr %s559, 8
        %s561 = scalar_lea.vmem [#allocation2], %s560
        // Predicated region
        $region45: #{tpu_custom_call.1} parent=43 // pred_check
          %p562 = pneg %p174
        $region46: #{tpu_custom_call.1} parent=43 // pred_check_branch
          %564 = sbr.rel (%p562) target = $region48
        $region47: #{tpu_custom_call.1} parent=43 // pred_region
          %s566 = ssub.s32 128, 128
          %567 = vsyncadd %s558, %s566
          %s568 = smul.addr %s20, 128
          %s569 = scalar_lea.hbm %s6, %s568
          %s571 = sshll.u32 %s561, 4
          %s572 = int_to_ptr.vmem [resolvable:$true] %s571
          %574 = dma.vmem_to_hbm [thread:$0]  %s572, 128, %s569, %s558
        $region48: #{tpu_custom_call.1} parent=43 // pred_fallthru
          _
      $region44: #{tpu_custom_call.1} parent=5 // pred_fallthru
        _
      %p575 = scmp.le.s32.totalorder 2, %s15
      // Predicated region
      $region49: #{tpu_custom_call.1} parent=5 // pred_check
        %p576 = pneg %p575
      $region50: #{tpu_custom_call.1} parent=5 // pred_check_branch
        %578 = sbr.rel (%p576) target = $region52
      $region51: #{tpu_custom_call.1} parent=5 // pred_region
        %s579 = ssub.s32 %s15, 2
        // Predicated region
        $region53: #{tpu_custom_call.1} parent=51 // pred_check
          %p580 = pneg %p180
        $region54: #{tpu_custom_call.1} parent=51 // pred_check_branch
          %582 = sbr.rel (%p580) target = $region56
        $region55: #{tpu_custom_call.1} parent=51 // pred_region
          %s583 = sand.u32 %s165, 1
          %s584 = scalar_lea.sflag [#allocation3], %s583
          %s585 = sand.u32 %s165, 1
          %s586 = smul.addr %s585, 8
          %s587 = scalar_lea.vmem [#allocation2], %s586
          %588 = dma.done %s584, 128
        $region56: #{tpu_custom_call.1} parent=51 // pred_fallthru
          _
      $region52: #{tpu_custom_call.1} parent=5 // pred_fallthru
        _
    $region6: #{tpu_custom_call.1} parent=1 // loop_footer
      %s19 = sadd.s32 1, %s15
    $region7: #{tpu_custom_call.1} parent=1 // loop_footer_branch
      %14 = sbr.rel target = $region3
    $region8: #{tpu_custom_call.1} parent=1 // loop_exit
      _
    %589 = vsyncpa [#allocation3], 1
    %s590 = scalar_lea.sflag [#allocation3], 1
    %591 = vsyncpa %s590, 1

</llo_original>
